<compile_context>
chip_gen: v7x
topology: tpu7x:2x2x1
jax: 0.10.0
libtpu: 0.0.40
codegen_flags: <defaults>
</compile_context>

<pallas_src>
import functools

import jax
import jax.numpy as jnp
from jax import lax
from jax.experimental import pallas as pl
from jax.experimental.pallas import tpu as pltpu


def _round_up(x, m):
    return (x + m - 1) // m * m


def _pick_tn(d, cap=512):
    """Largest lane-dense (multiple of 128) tile that divides d, capped at `cap`."""
    for tn in (cap, 384, 256, 128):
        if tn <= d and d % tn == 0 and tn % 128 == 0:
            return tn
    return d  # fall back to full width (still one block, equal to the array dim)


# ---------------------------------------------------------------------------
# Fused kernel: LayerNorm + Linear(dim, dim) + bias + residual
# ---------------------------------------------------------------------------
def _pre_norm_linear_residual_kernel(x_ref, xres_ref, g_ref, b_ref, w_ref,
                                     bias_ref, o_ref, *, eps):
    # x_ref:    (tm, D)  full-width rows (needed for LN stats and the K contraction)
    # xres_ref: (tm, tn) same rows, column tile used for the residual add
    # g_ref/b_ref: (1, D) LayerNorm affine params
    # w_ref:    (tn, D)  PyTorch Linear layout (out, in), tiled over `out`
    # bias_ref: (1, tn)
    # o_ref:    (tm, tn)
    x = x_ref[...].astype(jnp.float32)
    mean = jnp.mean(x, axis=-1, keepdims=True)
    xc = x - mean
    var = jnp.mean(xc * xc, axis=-1, keepdims=True)
    inv = lax.rsqrt(var + eps)                                  # EUP
    normed = xc * inv * g_ref[...].astype(jnp.float32) + b_ref[...].astype(jnp.float32)

    # Contract LN output (tm, D) with the weight tile (tn, D) on the D axis.
    # No host-side weight.T: contraction dims (((1,), (1,)), ((), ())).
    acc = lax.dot_general(
        normed.astype(w_ref.dtype), w_ref[...],
        dimension_numbers=(((1,), (1,)), ((), ())),
        preferred_element_type=jnp.float32)                     # MXU, f32 accumulate

    out = acc + bias_ref[...].astype(jnp.float32) + xres_ref[...].astype(jnp.float32)
    o_ref[...] = out.astype(o_ref.dtype)


def pre_norm_residual_linear(x, ln_gamma, ln_beta, weight, bias, *,
                             eps=1e-5, tm=256, tn_cap=512):
    """PreNormResidual with fn = nn.Linear(dim, dim), fused into one Pallas kernel.

    x: (B, N, D); ln_gamma/ln_beta: (D,); weight: (D, D) in PyTorch (out, in) layout;
    bias: (D,).  tm defaults to 256 (good for v6e/v7x); pass tm=128 on v5e.
    """
    B, N, D = x.shape
    assert weight.shape == (D, D) and bias.shape == (D,)
    M = B * N
    x2d = x.reshape(M, D)

    # Row tiling: MXU-sized tiles, cdiv grid + zero padding for the tail rows.
    tm_eff = min(tm, _round_up(M, 8))
    M_pad = _round_up(M, tm_eff)
    if M_pad != M:
        x2d = jnp.pad(x2d, ((0, M_pad - M), (0, 0)))

    # Output-feature tiling: lane-dense tiles bound the weight block in VMEM.
    tn = _pick_tn(D, tn_cap)
    grid = (M_pad // tm_eff, D // tn)

    g2d = ln_gamma.reshape(1, D)
    b2d = ln_beta.reshape(1, D)
    bias2d = bias.reshape(1, D)

    # Explicit VMEM budget (double-buffered blocks + headroom), capped for v7x (64 MiB).
    xb = x2d.dtype.itemsize
    block_bytes = (tm_eff * D * xb                      # x rows
                   + tm_eff * tn * xb                   # residual tile
                   + 2 * D * g2d.dtype.itemsize         # gamma + beta
                   + tn * D * weight.dtype.itemsize     # weight tile
                   + tn * bias.dtype.itemsize           # bias tile
                   + tm_eff * tn * xb)                  # output tile
    vmem_limit = int(min(max(2 * block_bytes + (4 << 20), 16 << 20), 64 << 20))

    cost = pl.CostEstimate(
        flops=2 * M_pad * D * D + 8 * M_pad * D,
        transcendentals=M_pad,
        bytes_accessed=(2 * M_pad * D * xb
                        + weight.size * weight.dtype.itemsize
                        + bias.size * bias.dtype.itemsize
                        + 2 * D * g2d.dtype.itemsize))

    y2d = pl.pallas_call(
        functools.partial(_pre_norm_linear_residual_kernel, eps=eps),
        out_shape=jax.ShapeDtypeStruct((M_pad, D), x.dtype),
        grid_spec=pltpu.PrefetchScalarGridSpec(
            num_scalar_prefetch=0,
            grid=grid,
            in_specs=[
                pl.BlockSpec((tm_eff, D), lambda i, j: (i, 0)),   # x rows (full width)
                pl.BlockSpec((tm_eff, tn), lambda i, j: (i, j)),  # x residual tile
                pl.BlockSpec((1, D), lambda i, j: (0, 0)),        # LN gamma
                pl.BlockSpec((1, D), lambda i, j: (0, 0)),        # LN beta
                pl.BlockSpec((tn, D), lambda i, j: (j, 0)),       # weight (out, in)
                pl.BlockSpec((1, tn), lambda i, j: (0, j)),       # linear bias
            ],
            out_specs=pl.BlockSpec((tm_eff, tn), lambda i, j: (i, j)),
        ),
        compiler_params=pltpu.CompilerParams(
            dimension_semantics=("parallel", "parallel"),
            vmem_limit_bytes=vmem_limit),
        cost_estimate=cost,
    )(x2d, x2d, g2d, b2d, weight, bias2d)

    return y2d[:M].reshape(B, N, D)


# ---------------------------------------------------------------------------
# Generic path: Pallas LayerNorm kernel + arbitrary JAX fn + residual
# ---------------------------------------------------------------------------
def _layer_norm_kernel(x_ref, g_ref, b_ref, o_ref, *, eps):
    x = x_ref[...].astype(jnp.float32)
    mean = jnp.mean(x, axis=-1, keepdims=True)
    xc = x - mean
    var = jnp.mean(xc * xc, axis=-1, keepdims=True)
    inv = lax.rsqrt(var + eps)
    o_ref[...] = (xc * inv * g_ref[...].astype(jnp.float32)
                  + b_ref[...].astype(jnp.float32)).astype(o_ref.dtype)


def layer_norm_pallas(x, gamma, beta, *, eps=1e-5, tm=256):
    B, N, D = x.shape
    M = B * N
    x2d = x.reshape(M, D)
    tm_eff = min(tm, _round_up(M, 8))
    M_pad = _round_up(M, tm_eff)
    if M_pad != M:
        x2d = jnp.pad(x2d, ((0, M_pad - M), (0, 0)))
    y2d = pl.pallas_call(
        functools.partial(_layer_norm_kernel, eps=eps),
        out_shape=jax.ShapeDtypeStruct((M_pad, D), x.dtype),
        grid_spec=pltpu.PrefetchScalarGridSpec(
            num_scalar_prefetch=0,
            grid=(M_pad // tm_eff,),
            in_specs=[pl.BlockSpec((tm_eff, D), lambda i: (i, 0)),
                      pl.BlockSpec((1, D), lambda i: (0, 0)),
                      pl.BlockSpec((1, D), lambda i: (0, 0))],
            out_specs=pl.BlockSpec((tm_eff, D), lambda i: (i, 0)),
        ),
        compiler_params=pltpu.CompilerParams(dimension_semantics=("parallel",)),
    )(x2d, gamma.reshape(1, D), beta.reshape(1, D))
    return y2d[:M].reshape(B, N, D)


def pre_norm_residual(x, ln_gamma, ln_beta, fn, *, eps=1e-5, **kwargs):
    """Generic PreNormResidual: fn(LayerNorm(x), **kwargs) + x for arbitrary JAX fn."""
    return fn(layer_norm_pallas(x, ln_gamma, ln_beta, eps=eps), **kwargs) + x


if __name__ == "__main__":
    B, N, D = 2, 16, 128  # D is a multiple of 128 -> lane-dense blocks / unmasked stores
    eps = 1e-5

    key = jax.random.PRNGKey(0)
    kx, kg, kb, kw, kb2 = jax.random.split(key, 5)
    x = jax.random.normal(kx, (B, N, D), dtype=jnp.float32)
    gamma = 1.0 + 0.1 * jax.random.normal(kg, (D,), dtype=jnp.float32)
    beta = 0.1 * jax.random.normal(kb, (D,), dtype=jnp.float32)
    weight = 0.02 * jax.random.normal(kw, (D, D), dtype=jnp.float32)  # (out, in)
    bias = 0.01 * jax.random.normal(kb2, (D,), dtype=jnp.float32)

    # Fused kernel: PreNormResidual with fn = Linear(D, D)
    out = pre_norm_residual_linear(x, gamma, beta, weight, bias, eps=eps)
    out = jax.block_until_ready(out)

    # Reference (same math as the PyTorch module with fn = nn.Linear)
    def ln_ref(z):
        mu = jnp.mean(z, axis=-1, keepdims=True)
        va = jnp.mean((z - mu) ** 2, axis=-1, keepdims=True)
        return (z - mu) / jnp.sqrt(va + eps) * gamma + beta

    ref = ln_ref(x) @ weight.T + bias + x
    assert out.shape == x.shape
    assert jnp.allclose(out, ref, atol=1e-4, rtol=1e-4), float(jnp.max(jnp.abs(out - ref)))

    # Generic path with an arbitrary fn (here the same linear, applied in plain JAX)
    out2 = pre_norm_residual(x, gamma, beta, lambda z: z @ weight.T + bias, eps=eps)
    out2 = jax.block_until_ready(out2)
    assert jnp.allclose(out2, ref, atol=1e-4, rtol=1e-4)

    print("KERNEL_OK")
</pallas_src>

<mosaic_0001>
module attributes {stable_mosaic.version = 11 : i64} {
  func.func @_pre_norm_linear_residual_kernel(%arg0: i32, %arg1: i32, %arg2: memref<32x128xf32, #tpu.memory_space<vmem>>, %arg3: memref<32x128xf32, #tpu.memory_space<vmem>>, %arg4: memref<1x128xf32, #tpu.memory_space<vmem>>, %arg5: memref<1x128xf32, #tpu.memory_space<vmem>>, %arg6: memref<128x128xf32, #tpu.memory_space<vmem>>, %arg7: memref<1x128xf32, #tpu.memory_space<vmem>>, %arg8: memref<32x128xf32, #tpu.memory_space<vmem>>) attributes {dimension_semantics = [#tpu.dimension_semantics<parallel>, #tpu.dimension_semantics<parallel>], iteration_bounds = array<i64: 1, 1>, scalar_prefetch = 0 : i64, scratch_operands = 0 : i64, tpu.core_type = #tpu.core_type<tc>, window_params = [{transform_indices = @transform_0, window_bounds = array<i64: 32, 128>}, {transform_indices = @transform_1, window_bounds = array<i64: 32, 128>}, {pipeline_mode = #tpu.pipeline_mode<synchronous>, transform_indices = @transform_2, window_bounds = array<i64: 1, 128>}, {pipeline_mode = #tpu.pipeline_mode<synchronous>, transform_indices = @transform_3, window_bounds = array<i64: 1, 128>}, {transform_indices = @transform_4, window_bounds = array<i64: 128, 128>}, {transform_indices = @transform_5, window_bounds = array<i64: 1, 128>}, {transform_indices = @transform_6, window_bounds = array<i64: 32, 128>}]} {
    %c0 = arith.constant 0 : index
    %c0_0 = arith.constant 0 : index
    %0 = vector.load %arg2[%c0, %c0_0] : memref<32x128xf32, #tpu.memory_space<vmem>>, vector<32x128xf32>
    %cst = arith.constant dense<0.000000e+00> : vector<32xf32>
    %1 = vector.multi_reduction <add>, %0, %cst [1] : vector<32x128xf32> to vector<32xf32>
    %2 = vector.shape_cast %1 : vector<32xf32> to vector<32x1xf32>
    %cst_1 = arith.constant 1.280000e+02 : f32
    %3 = vector.broadcast %cst_1 : f32 to vector<32x1xf32>
    %4 = arith.divf %2, %3 : vector<32x1xf32>
    %5 = vector.broadcast %4 : vector<32x1xf32> to vector<32x128xf32>
    %6 = arith.subf %0, %5 : vector<32x128xf32>
    %7 = arith.mulf %6, %6 : vector<32x128xf32>
    %cst_2 = arith.constant dense<0.000000e+00> : vector<32xf32>
    %8 = vector.multi_reduction <add>, %7, %cst_2 [1] : vector<32x128xf32> to vector<32xf32>
    %9 = vector.shape_cast %8 : vector<32xf32> to vector<32x1xf32>
    %cst_3 = arith.constant 1.280000e+02 : f32
    %10 = vector.broadcast %cst_3 : f32 to vector<32x1xf32>
    %11 = arith.divf %9, %10 : vector<32x1xf32>
    %cst_4 = arith.constant 9.99999974E-6 : f32
    %12 = vector.broadcast %cst_4 : f32 to vector<32x1xf32>
    %13 = arith.addf %11, %12 : vector<32x1xf32>
    %14 = math.rsqrt %13 : vector<32x1xf32>
    %15 = vector.broadcast %14 : vector<32x1xf32> to vector<32x128xf32>
    %16 = arith.mulf %6, %15 : vector<32x128xf32>
    %c0_5 = arith.constant 0 : index
    %c0_6 = arith.constant 0 : index
    %17 = vector.load %arg4[%c0_5, %c0_6] : memref<1x128xf32, #tpu.memory_space<vmem>>, vector<1x128xf32>
    %18 = vector.broadcast %17 : vector<1x128xf32> to vector<32x128xf32>
    %19 = arith.mulf %16, %18 : vector<32x128xf32>
    %c0_7 = arith.constant 0 : index
    %c0_8 = arith.constant 0 : index
    %20 = vector.load %arg5[%c0_7, %c0_8] : memref<1x128xf32, #tpu.memory_space<vmem>>, vector<1x128xf32>
    %21 = vector.broadcast %20 : vector<1x128xf32> to vector<32x128xf32>
    %22 = arith.addf %19, %21 : vector<32x128xf32>
    %c0_9 = arith.constant 0 : index
    %c0_10 = arith.constant 0 : index
    %23 = vector.load %arg6[%c0_9, %c0_10] : memref<128x128xf32, #tpu.memory_space<vmem>>, vector<128x128xf32>
    %cst_11 = arith.constant dense<0.000000e+00> : vector<32x128xf32>
    %24 = tpu.matmul %22, %23, %cst_11 {dimension_numbers = #tpu.dot_dimension_numbers<[1], [1], [0], [0], [0, 0, 1, 0], [], []>} : vector<32x128xf32>, vector<128x128xf32>, vector<32x128xf32> -> vector<32x128xf32>
    %c0_12 = arith.constant 0 : index
    %c0_13 = arith.constant 0 : index
    %25 = vector.load %arg7[%c0_12, %c0_13] : memref<1x128xf32, #tpu.memory_space<vmem>>, vector<1x128xf32>
    %26 = vector.broadcast %25 : vector<1x128xf32> to vector<32x128xf32>
    %27 = arith.addf %24, %26 : vector<32x128xf32>
    %c0_14 = arith.constant 0 : index
    %c0_15 = arith.constant 0 : index
    %28 = vector.load %arg3[%c0_14, %c0_15] : memref<32x128xf32, #tpu.memory_space<vmem>>, vector<32x128xf32>
    %29 = arith.addf %27, %28 : vector<32x128xf32>
    %c0_16 = arith.constant 0 : index
    %c0_17 = arith.constant 0 : index
    %30 = vector.load %arg8[%c0_16, %c0_17] : memref<32x128xf32, #tpu.memory_space<vmem>>, vector<32x128xf32>
    tpu.vector_store %arg8[%c0_16, %c0_17], %29 {strides = array<i32>} : memref<32x128xf32, #tpu.memory_space<vmem>>, vector<32x128xf32>,
    return
  }
  func.func @transform_0(%arg0: i32, %arg1: i32) -> (i32, i32) {
    %c0_i32 = arith.constant 0 : i32
    %c0_i32_0 = arith.constant 0 : i32
    return %arg0, %c0_i32 : i32, i32
  }
  func.func @transform_1(%arg0: i32, %arg1: i32) -> (i32, i32) {
    %c0_i32 = arith.constant 0 : i32
    return %arg0, %arg1 : i32, i32
  }
  func.func @transform_2(%arg0: i32, %arg1: i32) -> (i32, i32) {
    %c0_i32 = arith.constant 0 : i32
    %c0_i32_0 = arith.constant 0 : i32
    %c0_i32_1 = arith.constant 0 : i32
    return %c0_i32, %c0_i32_0 : i32, i32
  }
  func.func @transform_3(%arg0: i32, %arg1: i32) -> (i32, i32) {
    %c0_i32 = arith.constant 0 : i32
    %c0_i32_0 = arith.constant 0 : i32
    %c0_i32_1 = arith.constant 0 : i32
    return %c0_i32, %c0_i32_0 : i32, i32
  }
  func.func @transform_4(%arg0: i32, %arg1: i32) -> (i32, i32) {
    %c0_i32 = arith.constant 0 : i32
    %c0_i32_0 = arith.constant 0 : i32
    return %arg1, %c0_i32 : i32, i32
  }
  func.func @transform_5(%arg0: i32, %arg1: i32) -> (i32, i32) {
    %c0_i32 = arith.constant 0 : i32
    %c0_i32_0 = arith.constant 0 : i32
    return %c0_i32, %arg1 : i32, i32
  }
  func.func @transform_6(%arg0: i32, %arg1: i32) -> (i32, i32) {
    %c0_i32 = arith.constant 0 : i32
    return %arg0, %arg1 : i32, i32
  }
}

</mosaic_0001>

<llo_original>
// kernel: tpu_custom_call.1
$region0: #{tpu_custom_call.1}
  #allocation0 [shape = 'u32[]', space=smem, size = 0x4, offset = 0x4, fixed_abs, tag = 'smem constant byte address 0x4 - core index']
  #allocation1 [shape = 'u32[144,128]{1,0:T(1,128)}', space=vmem, size = 0x12000, scoped, tag = 'internal scratch']
  %s0 = inlined_call_operand.hbm [shape: f32[32,128], index: 0, kind: input, shape index: {}]
  %s1 = inlined_call_operand.hbm [shape: f32[32,128], index: 1, kind: input, shape index: {}]
  %s2 = inlined_call_operand.vmem [shape: f32[1,128], index: 2, kind: input, shape index: {}]
  %s3 = inlined_call_operand.vmem [shape: f32[1,128], index: 3, kind: input, shape index: {}]
  %s4 = inlined_call_operand.hbm [shape: f32[128,128], index: 4, kind: input, shape index: {}]
  %s5 = inlined_call_operand.vmem [shape: f32[1,128], index: 5, kind: input, shape index: {}]
  %s6 = inlined_call_operand.hbm [shape: f32[32,128], index: 6, kind: output, shape index: {}]
  %s7 = sld [smem:[#allocation0]]
  $region46: #{tpu_custom_call.1} parent=0
    _
  %s9 = ssub.s32 1, %s7
  %s10 = scalar_select 0, %s9, %s7
  $region1: #{tpu_custom_call.1} parent=0
    #allocation2 [shape = 'u8[16384]{0}', space=vmem, size = 0x4000, scoped, tag = 'input window, operand 0, single buffered']
    #allocation3 [shape = 's32[1]{0}', space=sflag, size = 0x4, scoped, tag = 'scoped memory for tpu_custom_call.1']
    #allocation4 [shape = 's32[1]{0}', space=sflag, size = 0x4, scoped, tag = 'scoped memory for tpu_custom_call.1']
    #allocation5 [shape = 'u8[16384]{0}', space=vmem, size = 0x4000, scoped, tag = 'input window, operand 1, single buffered']
    #allocation6 [shape = 's32[1]{0}', space=sflag, size = 0x4, scoped, tag = 'scoped memory for tpu_custom_call.1']
    #allocation7 [shape = 'u8[65536]{0}', space=vmem, size = 0x10000, scoped, tag = 'input window, operand 4, single buffered']
    #allocation8 [shape = 'u8[16384]{0}', space=vmem, size = 0x4000, scoped, tag = 'output window, operand 0, single buffered']
    %11 = vsyncpa [#allocation3], 0
    %12 = vsyncpa [#allocation6], 0
    %13 = vsyncpa [#allocation4], 0
    // Predicated region
    $region2: #{tpu_custom_call.1} parent=1 // pred_check
      _
    $region3: #{tpu_custom_call.1} parent=1 // pred_check_branch
      %15 = sbr.rel (0) target = $region5
    $region4: #{tpu_custom_call.1} parent=1 // pred_region
      %s17 = ssub.s32 512, 512
      %18 = vsyncadd [#allocation3], %s17
      %s19 = sshll.u32 [#allocation2], 4
      %s20 = int_to_ptr.vmem [resolvable:$true] %s19
      %25 = dma.hbm_to_vmem [thread:$0]  %s0, 512, %s20, [#allocation3], 128, 128, 8
    $region5: #{tpu_custom_call.1} parent=1 // pred_fallthru
      _
    // Predicated region
    $region6: #{tpu_custom_call.1} parent=1 // pred_check
      _
    $region7: #{tpu_custom_call.1} parent=1 // pred_check_branch
      %27 = sbr.rel (0) target = $region9
    $region8: #{tpu_custom_call.1} parent=1 // pred_region
      %s29 = ssub.s32 512, 512
      %30 = vsyncadd [#allocation6], %s29
      %s31 = sshll.u32 [#allocation5], 4
      %s32 = int_to_ptr.vmem [resolvable:$true] %s31
      %37 = dma.hbm_to_vmem [thread:$0]  %s1, 512, %s32, [#allocation6], 128, 128, 8
    $region9: #{tpu_custom_call.1} parent=1 // pred_fallthru
      _
    // Predicated region
    $region10: #{tpu_custom_call.1} parent=1 // pred_check
      _
    $region11: #{tpu_custom_call.1} parent=1 // pred_check_branch
      %39 = sbr.rel (0) target = $region13
    $region12: #{tpu_custom_call.1} parent=1 // pred_region
      _
    $region13: #{tpu_custom_call.1} parent=1 // pred_fallthru
      _
    // Predicated region
    $region14: #{tpu_custom_call.1} parent=1 // pred_check
      _
    $region15: #{tpu_custom_call.1} parent=1 // pred_check_branch
      %41 = sbr.rel (0) target = $region17
    $region16: #{tpu_custom_call.1} parent=1 // pred_region
      _
    $region17: #{tpu_custom_call.1} parent=1 // pred_fallthru
      _
    // Predicated region
    $region18: #{tpu_custom_call.1} parent=1 // pred_check
      _
    $region19: #{tpu_custom_call.1} parent=1 // pred_check_branch
      %43 = sbr.rel (0) target = $region21
    $region20: #{tpu_custom_call.1} parent=1 // pred_region
      %s45 = ssub.s32 2048, 2048
      %46 = vsyncadd [#allocation6], %s45
      %s47 = sshll.u32 [#allocation7], 4
      %s48 = int_to_ptr.vmem [resolvable:$true] %s47
      %53 = dma.hbm_to_vmem [thread:$0]  %s4, 2048, %s48, [#allocation6], 128, 128, 8
    $region21: #{tpu_custom_call.1} parent=1 // pred_fallthru
      _
    // Predicated region
    $region22: #{tpu_custom_call.1} parent=1 // pred_check
      _
    $region23: #{tpu_custom_call.1} parent=1 // pred_check_branch
      %55 = sbr.rel (0) target = $region25
    $region24: #{tpu_custom_call.1} parent=1 // pred_region
      _
    $region25: #{tpu_custom_call.1} parent=1 // pred_fallthru
      _
    // Predicated region
    $region26: #{tpu_custom_call.1} parent=1 // pred_check
      _
    $region27: #{tpu_custom_call.1} parent=1 // pred_check_branch
      %57 = sbr.rel (0) target = $region29
    $region28: #{tpu_custom_call.1} parent=1 // pred_region
      %58 = dma.done [#allocation3], 512
    $region29: #{tpu_custom_call.1} parent=1 // pred_fallthru
      _
    // Predicated region
    $region30: #{tpu_custom_call.1} parent=1 // pred_check
      _
    $region31: #{tpu_custom_call.1} parent=1 // pred_check_branch
      %60 = sbr.rel (0) target = $region33
    $region32: #{tpu_custom_call.1} parent=1 // pred_region
      %61 = dma.done [#allocation6], 512
    $region33: #{tpu_custom_call.1} parent=1 // pred_fallthru
      _
    // Predicated region
    $region34: #{tpu_custom_call.1} parent=1 // pred_check
      _
    $region35: #{tpu_custom_call.1} parent=1 // pred_check_branch
      %63 = sbr.rel (0) target = $region37
    $region36: #{tpu_custom_call.1} parent=1 // pred_region
      %64 = dma.done [#allocation6], 2048
    $region37: #{tpu_custom_call.1} parent=1 // pred_fallthru
      _
    %v65 = vld [vmem:[#allocation2] sm:$0xff]
    %v66 = vld [vmem:[#allocation2 + $0x8] sm:$0xff]
    %v67 = vld [vmem:[#allocation2 + $0x10] sm:$0xff]
    %v68 = vld [vmem:[#allocation2 + $0x18] sm:$0xff]
    %69 = vadd.xlane.f32.xlu0 %v65
    %v70 = vpop.xlane.xlu0 %69
    %71 = vadd.xlane.f32.xlu0 %v66
    %v72 = vpop.xlane.xlu0 %71
    %73 = vadd.xlane.f32.xlu0 %v67
    %v74 = vpop.xlane.xlu0 %73
    %75 = vadd.xlane.f32.xlu0 %v68
    %v76 = vpop.xlane.xlu0 %75
    %v77 = vrcp.pop 128.0
    %v78 = vmul.f32 %v70, %v77
    %v79 = vmul.f32 %v72, %v77
    %v80 = vmul.f32 %v74, %v77
    %v81 = vmul.f32 %v76, %v77
    %v82 = vsub.f32 %v65, %v78
    %v83 = vsub.f32 %v66, %v79
    %v84 = vsub.f32 %v67, %v80
    %v85 = vsub.f32 %v68, %v81
    %v86 = vmul.f32 %v82, %v82
    %v87 = vmul.f32 %v83, %v83
    %v88 = vmul.f32 %v84, %v84
    %v89 = vmul.f32 %v85, %v85
    %90 = vadd.xlane.f32.xlu0 %v86
    %v91 = vpop.xlane.xlu0 %90
    %92 = vadd.xlane.f32.xlu0 %v87
    %v93 = vpop.xlane.xlu0 %92
    %94 = vadd.xlane.f32.xlu0 %v88
    %v95 = vpop.xlane.xlu0 %94
    %96 = vadd.xlane.f32.xlu0 %v89
    %v97 = vpop.xlane.xlu0 %96
    %v98 = vmul.f32 %v91, %v77
    %v99 = vmul.f32 %v93, %v77
    %v100 = vmul.f32 %v95, %v77
    %v101 = vmul.f32 %v97, %v77
    %v102 = vadd.f32 %v98, 1e-05
    %v103 = vadd.f32 %v99, 1e-05
    %v104 = vadd.f32 %v100, 1e-05
    %v105 = vadd.f32 %v101, 1e-05
    %v106 = vrsqrt.pop %v102
    %v107 = vrsqrt.pop %v103
    %v108 = vrsqrt.pop %v104
    %v109 = vrsqrt.pop %v105
    %v110 = vmul.f32 %v82, %v106
    %v111 = vmul.f32 %v83, %v107
    %v112 = vmul.f32 %v84, %v108
    %v113 = vmul.f32 %v85, %v109
    %v114 = vld [vmem:[%s2] sm:$0x1]
    %v116 = vlaneseq
    %v117 = vshrl.u32 %v116, 7
    %v118 = vsub.s32 0, %v117
    %v119 = vrot.slane %v114, %v118
    %v121 = vmul.f32 %v110, %v119
    %v122 = vmul.f32 %v111, %v119
    %v123 = vmul.f32 %v112, %v119
    %v124 = vmul.f32 %v113, %v119
    %v125 = vld [vmem:[%s3] sm:$0x1]
    %v127 = vlaneseq
    %v128 = vshrl.u32 %v127, 7
    %v129 = vsub.s32 0, %v128
    %v130 = vrot.slane %v125, %v129
    %v132 = vadd.f32 %v121, %v130
    %v133 = vadd.f32 %v122, %v130
    %v134 = vadd.f32 %v123, %v130
    %v135 = vadd.f32 %v124, %v130
    %v136 = vld [vmem:[#allocation7] sm:$0xff]
    %v137 = vld [vmem:[#allocation7 + $0x8] sm:$0xff]
    %v138 = vld [vmem:[#allocation7 + $0x10] sm:$0xff]
    %v139 = vld [vmem:[#allocation7 + $0x18] sm:$0xff]
    %v140 = vld [vmem:[#allocation7 + $0x20] sm:$0xff]
    %v141 = vld [vmem:[#allocation7 + $0x28] sm:$0xff]
    %v142 = vld [vmem:[#allocation7 + $0x30] sm:$0xff]
    %v143 = vld [vmem:[#allocation7 + $0x38] sm:$0xff]
    %v144 = vld [vmem:[#allocation7 + $0x40] sm:$0xff]
    %v145 = vld [vmem:[#allocation7 + $0x48] sm:$0xff]
    %v146 = vld [vmem:[#allocation7 + $0x50] sm:$0xff]
    %v147 = vld [vmem:[#allocation7 + $0x58] sm:$0xff]
    %v148 = vld [vmem:[#allocation7 + $0x60] sm:$0xff]
    %v149 = vld [vmem:[#allocation7 + $0x68] sm:$0xff]
    %v150 = vld [vmem:[#allocation7 + $0x70] sm:$0xff]
    %v151 = vld [vmem:[#allocation7 + $0x78] sm:$0xff]
    %v152 = vld [vmem:[%s5] sm:$0x1]
    %v154 = vlaneseq
    %v155 = vshrl.u32 %v154, 7
    %v156 = vsub.s32 0, %v155
    %v157 = vrot.slane %v152, %v156
    %159 = vmatprep.subr.mxu0 0.0
    %160 = vmatpush1.xpose.msra.mxu0 %v136
    %161 = vmatprep.subr.mxu0 0.0
    %162 = vmatpush1.xpose.msra.mxu0 %v137
    %163 = vmatprep.subr.mxu0 0.0
    %164 = vmatpush1.xpose.msra.mxu0 %v138
    %165 = vmatprep.subr.mxu0 0.0
    %166 = vmatpush1.xpose.msra.mxu0 %v139
    %167 = vmatprep.subr.mxu0 0.0
    %168 = vmatpush1.xpose.msra.mxu0 %v140
    %169 = vmatprep.subr.mxu0 0.0
    %170 = vmatpush1.xpose.msra.mxu0 %v141
    %171 = vmatprep.subr.mxu0 0.0
    %172 = vmatpush1.xpose.msra.mxu0 %v142
    %173 = vmatprep.subr.mxu0 0.0
    %174 = vmatpush1.xpose.msra.mxu0 %v143
    %175 = vmatprep.subr.mxu0 0.0
    %176 = vmatpush1.xpose.msra.mxu0 %v144
    %177 = vmatprep.subr.mxu0 0.0
    %178 = vmatpush1.xpose.msra.mxu0 %v145
    %179 = vmatprep.subr.mxu0 0.0
    %180 = vmatpush1.xpose.msra.mxu0 %v146
    %181 = vmatprep.subr.mxu0 0.0
    %182 = vmatpush1.xpose.msra.mxu0 %v147
    %183 = vmatprep.subr.mxu0 0.0
    %184 = vmatpush1.xpose.msra.mxu0 %v148
    %185 = vmatprep.subr.mxu0 0.0
    %186 = vmatpush1.xpose.msra.mxu0 %v149
    %187 = vmatprep.subr.mxu0 0.0
    %188 = vmatpush1.xpose.msra.mxu0 %v150
    %189 = vmatprep.subr.mxu0 0.0
    %190 = vmatpush1.xpose.msra.mxu0 %v151
    %191 = vmatprep.subr.mxu0 0.0
    %192 = vmatpush1.xpose.msra.mxu0 0.0
    %193 = vmatprep.subr.mxu0 0.0
    %194 = vmatpush1.xpose.msra.mxu0 0.0
    %195 = vmatprep.subr.mxu0 0.0
    %196 = vmatpush1.xpose.msra.mxu0 0.0
    %197 = vmatprep.subr.mxu0 0.0
    %198 = vmatpush1.xpose.msra.mxu0 0.0
    %199 = vmatprep.subr.mxu0 0.0
    %200 = vmatpush1.xpose.msra.mxu0 0.0
    %201 = vmatprep.subr.mxu0 0.0
    %202 = vmatpush1.xpose.msra.mxu0 0.0
    %203 = vmatprep.subr.mxu0 0.0
    %204 = vmatpush1.xpose.msra.mxu0 0.0
    %205 = vmatprep.subr.mxu0 0.0
    %206 = vmatpush1.xpose.msra.mxu0 0.0
    %207 = vmatprep.subr.mxu0 0.0
    %208 = vmatpush1.xpose.msra.mxu0 0.0
    %209 = vmatprep.subr.mxu0 0.0
    %210 = vmatpush1.xpose.msra.mxu0 0.0
    %211 = vmatprep.subr.mxu0 0.0
    %212 = vmatpush1.xpose.msra.mxu0 0.0
    %213 = vmatprep.subr.mxu0 0.0
    %214 = vmatpush1.xpose.msra.mxu0 0.0
    %215 = vmatprep.subr.mxu0 0.0
    %216 = vmatpush1.xpose.msra.mxu0 0.0
    %217 = vmatprep.subr.mxu0 0.0
    %218 = vmatpush1.xpose.msra.mxu0 0.0
    %219 = vmatprep.subr.mxu0 0.0
    %220 = vmatpush1.xpose.msra.mxu0 0.0
    %221 = vmatprep.subr.mxu0 0.0
    %222 = vmatpush1.xpose.msra.mxu0 0.0
    %223 = vmatprep.mubr.f32.mxu0 0.0
    %224 = vmatmul.mubr.f32.gmra.mrb[0].mxu0 %v132
    %v225 = vpop.f32.mrb[0].mxu0
    %v226 = vadd.f32 %v157, %v225
    %v227 = vpop.f32.mrb[0].mxu0
    %228 = vmatprep.mubr.f32.mxu0 0.0
    %229 = vmatmul.mubr.f32.gmra.mrb[0].mxu0 %v133
    %v230 = vpop.f32.mrb[0].mxu0
    %v231 = vadd.f32 %v157, %v230
    %v232 = vpop.f32.mrb[0].mxu0
    %233 = vmatprep.mubr.f32.mxu0 0.0
    %234 = vmatmul.mubr.f32.gmra.mrb[0].mxu0 %v134
    %v235 = vpop.f32.mrb[0].mxu0
    %v236 = vadd.f32 %v157, %v235
    %v237 = vpop.f32.mrb[0].mxu0
    %238 = vmatprep.mubr.f32.mxu0 0.0
    %239 = vmatmul.mubr.f32.gmra.mrb[0].mxu0 %v135
    %v240 = vpop.f32.mrb[0].mxu0
    %v241 = vadd.f32 %v157, %v240
    %v242 = vpop.f32.mrb[0].mxu0
    %243 = vdwg.mxu0
    %v244 = vld [vmem:[#allocation5] sm:$0xff]
    %v245 = vld [vmem:[#allocation5 + $0x8] sm:$0xff]
    %v246 = vld [vmem:[#allocation5 + $0x10] sm:$0xff]
    %v247 = vld [vmem:[#allocation5 + $0x18] sm:$0xff]
    %v248 = vadd.f32 %v226, %v244
    %v249 = vadd.f32 %v231, %v245
    %v250 = vadd.f32 %v236, %v246
    %v251 = vadd.f32 %v241, %v247
    %252 = vst [vmem:[#allocation8] sm:$0xff] %v248
    %253 = vst [vmem:[#allocation8 + $0x8] sm:$0xff] %v249
    %254 = vst [vmem:[#allocation8 + $0x10] sm:$0xff] %v250
    %255 = vst [vmem:[#allocation8 + $0x18] sm:$0xff] %v251
    // Predicated region
    $region38: #{tpu_custom_call.1} parent=1 // pred_check
      _
    $region39: #{tpu_custom_call.1} parent=1 // pred_check_branch
      %257 = sbr.rel (0) target = $region41
    $region40: #{tpu_custom_call.1} parent=1 // pred_region
      %s259 = ssub.s32 512, 512
      %260 = vsyncadd [#allocation4], %s259
      %s261 = sshll.u32 [#allocation8], 4
      %s262 = int_to_ptr.vmem [resolvable:$true] %s261
      %267 = dma.vmem_to_hbm [thread:$0]  %s262, 512, %s6, [#allocation4], 128, 128, 8
    $region41: #{tpu_custom_call.1} parent=1 // pred_fallthru
      _
    // Predicated region
    $region42: #{tpu_custom_call.1} parent=1 // pred_check
      _
    $region43: #{tpu_custom_call.1} parent=1 // pred_check_branch
      %269 = sbr.rel (0) target = $region45
    $region44: #{tpu_custom_call.1} parent=1 // pred_region
      %270 = dma.done [#allocation4], 512
    $region45: #{tpu_custom_call.1} parent=1 // pred_fallthru
      _
    %271 = vsyncpa [#allocation3], 1
    %272 = vsyncpa [#allocation6], 1
    %273 = vsyncpa [#allocation4], 1

</llo_original>
